<compile_context>
chip_gen: v6e
topology: v6e:2x2x1
jax: 0.10.0
libtpu: 0.0.40
codegen_flags: <defaults>
</compile_context>

<pallas_src>
import functools

import jax
import jax.numpy as jnp
from jax import lax
from jax.experimental import pallas as pl
from jax.experimental.pallas import tpu as pltpu


def _reflect_pads(ksize):
    if ksize % 2 == 1:
        p = ksize // 2
        return (p, p), (p, p)
    # PyTorch ReflectionPad2d((left, right, top, bottom)) for even ksize
    return (ksize // 2, ksize // 2 - 1), (ksize // 2, ksize // 2 - 1)


def _banded_weights(kern_b, w, ksize, plft):
    """Per-batch, per-row-offset banded weight matrices with W-reflection folded in.

    M[b, i, s, v] = sum_j kern_b[b, i, j] * [reflect_w(v - plft + j) == s]
    so that out[.., y, v] = sum_i band_i[.., y, :] @ M[b, i, :, v], where band_i is
    the H-padded (but W-unpadded) row band of the input plane.
    """
    v = jnp.arange(w)
    j = jnp.arange(ksize)
    t = v[None, :] + j[:, None] - plft                       # (K, W) source col pre-reflect
    src = jnp.where(t < 0, -t, t)
    src = jnp.where(src > w - 1, 2 * (w - 1) - src, src)     # (K, W) reflected source col
    onehot = (src[:, :, None] == jnp.arange(w)[None, None, :]).astype(jnp.float32)  # (K, v, s)
    return jnp.einsum("bij,jvs->bisv", kern_b.astype(jnp.float32), onehot)          # (b, K, W, W)


def _blur_kernel(m_ref, x_ref, out_ref, xp_ref, *, H, W, K, CB, pt, pb):
    # m_ref : (1, K, W, W) f32 banded weights for this batch element (VMEM)
    # x_ref : (1, CB, H, W) input block, out_ref: (1, CB, H, W) output block
    # xp_ref: (CB, Hp, W) f32 scratch, Hp = H + pt + pb
    xv = x_ref[0].astype(jnp.float32)                        # (CB, H, W), cast once

    # ---- H-reflection halo into the scratch plane (sublane-axis writes only) ----
    xp_ref[:, pt:pt + H, :] = xv
    for r in range(pt):                                      # padded row r <- original row (pt - r)
        xp_ref[:, r, :] = xv[:, pt - r, :]
    for q in range(pb):                                      # padded row pt+H+q <- row (H-2-q)
        xp_ref[:, pt + H + q, :] = xv[:, H - 2 - q, :]

    # ---- K banded MXU matmuls: acc += band_i @ M_i (W-reflection folded into M_i) ----
    def tap(i, acc):
        band = xp_ref[:, pl.ds(i, H), :].reshape(CB * H, W)  # row band, W unpadded
        mi = m_ref[0, i]                                     # (W, W)
        return acc + jnp.dot(band, mi, preferred_element_type=jnp.float32)

    acc = lax.fori_loop(0, K, tap, jnp.zeros((CB * H, W), jnp.float32))
    out_ref[0] = acc.reshape(CB, H, W).astype(out_ref.dtype)


def _vmem_capacity_bytes():
    try:
        info = pltpu.get_tpu_info()
        cap = getattr(info, "vmem_capacity_bytes", None)
        if cap:
            return int(cap)
    except Exception:
        pass
    return 64 << 20  # conservative default (v7x per-core VMEM)


def _pick_cblk(b, c, h, w, hp, ksize, itemsize, budget):
    """Largest divisor of c whose per-step VMEM footprint fits the budget."""

    def footprint(d):
        io = 2 * d * h * w * 2 * itemsize        # in + out blocks, double-buffered
        xp = d * hp * w * 4                      # H-padded f32 scratch (single buffer)
        work = 4 * d * h * w * 4                 # xv + band + dot partial + acc (f32)
        m = 2 * ksize * w * w * 4                # banded weight block, double-buffered
        return io + xp + work + m

    divs = [d for d in range(1, c + 1) if c % d == 0]
    fitting = [d for d in divs if footprint(d) <= budget]
    # TODO(synk): if even d=1 does not fit (huge planes), switch to H row-band tiling.
    best = max(fitting) if fitting else 1
    if b * (c // best) < 2:                      # keep >= 2 programs so both v7x TCs get work
        cand = [d for d in (fitting if fitting else divs) if b * (c // d) >= 2]
        if cand:
            best = max(cand)
    return best


def batch_blur(x, kernel, ksize):
    """Pallas implementation of BatchBlur.forward.

    x:      (b, c, h, w)
    kernel: (ksize, ksize)    -> same kernel for every image, or
            (b, ksize, ksize) -> one kernel per batch element
    Requires h > pad_bottom and w > pad_right (same constraint as ReflectionPad2d).
    """
    b, c, h, w = x.shape
    (pt, pb), (plft, pr) = _reflect_pads(ksize)
    hp = h + pt + pb

    if kernel.ndim == 2:
        kern_b = jnp.broadcast_to(kernel, (b, ksize, ksize))
    else:
        kern_b = kernel.reshape(b, ksize, ksize)
    m = _banded_weights(kern_b, w, ksize, plft)              # (b, K, W, W) f32

    itemsize = jnp.dtype(x.dtype).itemsize
    cap = _vmem_capacity_bytes()
    budget = int(cap * 0.6)
    cblk = _pick_cblk(b, c, h, w, hp, ksize, itemsize, budget)
    grid = (b, c // cblk)

    cost = pl.CostEstimate(
        flops=2 * ksize * b * c * h * w * w,                 # K banded matmuls
        transcendentals=0,
        bytes_accessed=2 * b * c * h * w * itemsize + b * ksize * w * w * 4)

    body = functools.partial(_blur_kernel, H=h, W=w, K=ksize, CB=cblk, pt=pt, pb=pb)
    return pl.pallas_call(
        body,
        out_shape=jax.ShapeDtypeStruct((b, c, h, w), x.dtype),
        grid_spec=pltpu.PrefetchScalarGridSpec(
            num_scalar_prefetch=0,
            grid=grid,
            in_specs=[
                # banded weights: block index depends only on the batch axis
                pl.BlockSpec((1, ksize, w, w), lambda bi, ci: (bi, 0, 0, 0)),
                pl.BlockSpec((1, cblk, h, w), lambda bi, ci: (bi, ci, 0, 0)),
            ],
            out_specs=pl.BlockSpec((1, cblk, h, w), lambda bi, ci: (bi, ci, 0, 0)),
            scratch_shapes=[pltpu.VMEM((cblk, hp, w), jnp.float32)],
        ),
        compiler_params=pltpu.CompilerParams(
            dimension_semantics=("parallel", "parallel"),
            vmem_limit_bytes=int(cap * 0.9)),
        cost_estimate=cost,
    )(m, x)


def _reference_blur(x, kernel, ksize):
    """Pure-jnp reference with identical semantics (for correctness check)."""
    b, c, h, w = x.shape
    (pt, pb), (plft, pr) = _reflect_pads(ksize)
    x_pad = jnp.pad(x, ((0, 0), (0, 0), (pt, pb), (plft, pr)), mode="reflect")
    if kernel.ndim == 2:
        kern_b = jnp.broadcast_to(kernel, (b, ksize, ksize))
    else:
        kern_b = kernel.reshape(b, ksize, ksize)
    out = jnp.zeros((b, c, h, w), jnp.float32)
    for i in range(ksize):
        for j in range(ksize):
            out = out + kern_b[:, i, j][:, None, None, None] * x_pad[:, :, i:i + h, j:j + w]
    return out.astype(x.dtype)


if __name__ == "__main__":
    # Small shapes consistent with the module (kernel_size is a ctor arg).
    B, C, H, W = 2, 4, 16, 16
    KSIZE = 7

    key = jax.random.PRNGKey(0)
    kx, kk2, kk3 = jax.random.split(key, 3)

    x = jax.random.normal(kx, (B, C, H, W), dtype=jnp.float32)

    # Deterministic "blur" kernels: random positive weights, normalized to sum 1.
    k2d = jax.random.uniform(kk2, (KSIZE, KSIZE), dtype=jnp.float32)
    k2d = k2d / jnp.sum(k2d)
    k3d = jax.random.uniform(kk3, (B, KSIZE, KSIZE), dtype=jnp.float32)
    k3d = k3d / jnp.sum(k3d, axis=(1, 2), keepdims=True)

    # Per-batch kernel case (kernel.ndim == 3, grouped conv in PyTorch)
    out3 = jax.block_until_ready(batch_blur(x, k3d, KSIZE))
    ref3 = _reference_blur(x, k3d, KSIZE)
    assert out3.shape == (B, C, H, W)
    assert jnp.allclose(out3, ref3, atol=1e-4, rtol=1e-4)

    # Shared kernel case (kernel.ndim == 2)
    out2 = jax.block_until_ready(batch_blur(x, k2d, KSIZE))
    ref2 = _reference_blur(x, k2d, KSIZE)
    assert jnp.allclose(out2, ref2, atol=1e-4, rtol=1e-4)

    print("KERNEL_OK")
</pallas_src>

<mosaic_0001>
module attributes {stable_mosaic.version = 11 : i64} {
  func.func @_blur_kernel(%arg0: i32, %arg1: i32, %arg2: memref<1x7x16x16xf32, #tpu.memory_space<vmem>>, %arg3: memref<1x4x16x16xf32, #tpu.memory_space<vmem>>, %arg4: memref<1x4x16x16xf32, #tpu.memory_space<vmem>>, %arg5: memref<4x22x16xf32, #tpu.memory_space<vmem>>) attributes {dimension_semantics = [#tpu.dimension_semantics<parallel>, #tpu.dimension_semantics<parallel>], iteration_bounds = array<i64: 2, 1>, scalar_prefetch = 0 : i64, scratch_operands = 1 : i64, tpu.core_type = #tpu.core_type<tc>, window_params = [{transform_indices = @transform_0, window_bounds = array<i64: 1, 7, 16, 16>}, {transform_indices = @transform_1, window_bounds = array<i64: 1, 4, 16, 16>}, {transform_indices = @transform_2, window_bounds = array<i64: 1, 4, 16, 16>}]} {
    %c0 = arith.constant 0 : index
    %c0_0 = arith.constant 0 : index
    %c0_1 = arith.constant 0 : index
    %c0_2 = arith.constant 0 : index
    %0 = vector.load %arg3[%c0, %c0_0, %c0_1, %c0_2] : memref<1x4x16x16xf32, #tpu.memory_space<vmem>>, vector<1x4x16x16xf32>
    %1 = vector.shape_cast %0 : vector<1x4x16x16xf32> to vector<4x16x16xf32>
    %c0_3 = arith.constant 0 : index
    %c3 = arith.constant 3 : index
    %c0_4 = arith.constant 0 : index
    %2 = vector.load %arg5[%c0_3, %c3, %c0_4] : memref<4x22x16xf32, #tpu.memory_space<vmem>>, vector<4x16x16xf32>
    tpu.vector_store %arg5[%c0_3, %c3, %c0_4], %1 {strides = array<i32>} : memref<4x22x16xf32, #tpu.memory_space<vmem>>, vector<4x16x16xf32>,
    %3 = vector.extract_strided_slice %1 {offsets = [0, 3, 0], sizes = [4, 1, 16], strides = [1, 1, 1]} : vector<4x16x16xf32> to vector<4x1x16xf32>
    %4 = vector.shape_cast %3 : vector<4x1x16xf32> to vector<4x16xf32>
    %c0_5 = arith.constant 0 : index
    %c0_6 = arith.constant 0 : index
    %c0_7 = arith.constant 0 : index
    %5 = vector.load %arg5[%c0_5, %c0_6, %c0_7] : memref<4x22x16xf32, #tpu.memory_space<vmem>>, vector<4x1x16xf32>
    %6 = vector.shape_cast %5 : vector<4x1x16xf32> to vector<4x16xf32>
    %7 = vector.shape_cast %4 : vector<4x16xf32> to vector<4x1x16xf32>
    tpu.vector_store %arg5[%c0_5, %c0_6, %c0_7], %7 {strides = array<i32>} : memref<4x22x16xf32, #tpu.memory_space<vmem>>, vector<4x1x16xf32>,
    %8 = vector.extract_strided_slice %1 {offsets = [0, 2, 0], sizes = [4, 1, 16], strides = [1, 1, 1]} : vector<4x16x16xf32> to vector<4x1x16xf32>
    %9 = vector.shape_cast %8 : vector<4x1x16xf32> to vector<4x16xf32>
    %c0_8 = arith.constant 0 : index
    %c1 = arith.constant 1 : index
    %c0_9 = arith.constant 0 : index
    %10 = vector.load %arg5[%c0_8, %c1, %c0_9] : memref<4x22x16xf32, #tpu.memory_space<vmem>>, vector<4x1x16xf32>
    %11 = vector.shape_cast %10 : vector<4x1x16xf32> to vector<4x16xf32>
    %12 = vector.shape_cast %9 : vector<4x16xf32> to vector<4x1x16xf32>
    tpu.vector_store %arg5[%c0_8, %c1, %c0_9], %12 {strides = array<i32>} : memref<4x22x16xf32, #tpu.memory_space<vmem>>, vector<4x1x16xf32>,
    %13 = vector.extract_strided_slice %1 {offsets = [0, 1, 0], sizes = [4, 1, 16], strides = [1, 1, 1]} : vector<4x16x16xf32> to vector<4x1x16xf32>
    %14 = vector.shape_cast %13 : vector<4x1x16xf32> to vector<4x16xf32>
    %c0_10 = arith.constant 0 : index
    %c2 = arith.constant 2 : index
    %c0_11 = arith.constant 0 : index
    %15 = vector.load %arg5[%c0_10, %c2, %c0_11] : memref<4x22x16xf32, #tpu.memory_space<vmem>>, vector<4x1x16xf32>
    %16 = vector.shape_cast %15 : vector<4x1x16xf32> to vector<4x16xf32>
    %17 = vector.shape_cast %14 : vector<4x16xf32> to vector<4x1x16xf32>
    tpu.vector_store %arg5[%c0_10, %c2, %c0_11], %17 {strides = array<i32>} : memref<4x22x16xf32, #tpu.memory_space<vmem>>, vector<4x1x16xf32>,
    %18 = vector.extract_strided_slice %1 {offsets = [0, 14, 0], sizes = [4, 1, 16], strides = [1, 1, 1]} : vector<4x16x16xf32> to vector<4x1x16xf32>
    %19 = vector.shape_cast %18 : vector<4x1x16xf32> to vector<4x16xf32>
    %c0_12 = arith.constant 0 : index
    %c19 = arith.constant 19 : index
    %c0_13 = arith.constant 0 : index
    %20 = vector.load %arg5[%c0_12, %c19, %c0_13] : memref<4x22x16xf32, #tpu.memory_space<vmem>>, vector<4x1x16xf32>
    %21 = vector.shape_cast %20 : vector<4x1x16xf32> to vector<4x16xf32>
    %22 = vector.shape_cast %19 : vector<4x16xf32> to vector<4x1x16xf32>
    tpu.vector_store %arg5[%c0_12, %c19, %c0_13], %22 {strides = array<i32>} : memref<4x22x16xf32, #tpu.memory_space<vmem>>, vector<4x1x16xf32>,
    %23 = vector.extract_strided_slice %1 {offsets = [0, 13, 0], sizes = [4, 1, 16], strides = [1, 1, 1]} : vector<4x16x16xf32> to vector<4x1x16xf32>
    %24 = vector.shape_cast %23 : vector<4x1x16xf32> to vector<4x16xf32>
    %c0_14 = arith.constant 0 : index
    %c20 = arith.constant 20 : index
    %c0_15 = arith.constant 0 : index
    %25 = vector.load %arg5[%c0_14, %c20, %c0_15] : memref<4x22x16xf32, #tpu.memory_space<vmem>>, vector<4x1x16xf32>
    %26 = vector.shape_cast %25 : vector<4x1x16xf32> to vector<4x16xf32>
    %27 = vector.shape_cast %24 : vector<4x16xf32> to vector<4x1x16xf32>
    tpu.vector_store %arg5[%c0_14, %c20, %c0_15], %27 {strides = array<i32>} : memref<4x22x16xf32, #tpu.memory_space<vmem>>, vector<4x1x16xf32>,
    %28 = vector.extract_strided_slice %1 {offsets = [0, 12, 0], sizes = [4, 1, 16], strides = [1, 1, 1]} : vector<4x16x16xf32> to vector<4x1x16xf32>
    %29 = vector.shape_cast %28 : vector<4x1x16xf32> to vector<4x16xf32>
    %c0_16 = arith.constant 0 : index
    %c21 = arith.constant 21 : index
    %c0_17 = arith.constant 0 : index
    %30 = vector.load %arg5[%c0_16, %c21, %c0_17] : memref<4x22x16xf32, #tpu.memory_space<vmem>>, vector<4x1x16xf32>
    %31 = vector.shape_cast %30 : vector<4x1x16xf32> to vector<4x16xf32>
    %32 = vector.shape_cast %29 : vector<4x16xf32> to vector<4x1x16xf32>
    tpu.vector_store %arg5[%c0_16, %c21, %c0_17], %32 {strides = array<i32>} : memref<4x22x16xf32, #tpu.memory_space<vmem>>, vector<4x1x16xf32>,
    %cst = arith.constant 0.000000e+00 : f32
    %33 = vector.broadcast %cst : f32 to vector<64x16xf32>
    %c0_i32 = arith.constant 0 : i32
    %c7_i32 = arith.constant 7 : i32
    %34 = arith.addi %c0_i32, %c7_i32 : i32
    %c1_i32 = arith.constant 1 : i32
    %35 = scf.for %arg6 = %c0_i32 to %34 step %c1_i32 iter_args(%arg7 = %33) -> (vector<64x16xf32>)  : i32 {
      %c0_23 = arith.constant 0 : index
      %40 = arith.index_cast %arg6 : i32 to index
      %c0_24 = arith.constant 0 : index
      %41 = vector.load %arg5[%c0_23, %40, %c0_24] : memref<4x22x16xf32, #tpu.memory_space<vmem>>, vector<4x16x16xf32>
      %42 = vector.shape_cast %41 : vector<4x16x16xf32> to vector<64x16xf32>
      %c0_25 = arith.constant 0 : index
      %43 = arith.index_cast %arg6 : i32 to index
      %c0_26 = arith.constant 0 : index
      %c0_27 = arith.constant 0 : index
      %44 = vector.load %arg2[%c0_25, %43, %c0_26, %c0_27] : memref<1x7x16x16xf32, #tpu.memory_space<vmem>>, vector<1x1x16x16xf32>
      %45 = vector.shape_cast %44 : vector<1x1x16x16xf32> to vector<16x16xf32>
      %cst_28 = arith.constant dense<0.000000e+00> : vector<64x16xf32>
      %46 = tpu.matmul %42, %45, %cst_28 {dimension_numbers = #tpu.dot_dimension_numbers<[1], [0], [0], [1], [0, 0, 1, 1], [], []>} : vector<64x16xf32>, vector<16x16xf32>, vector<64x16xf32> -> vector<64x16xf32>
      %47 = arith.addf %arg7, %46 : vector<64x16xf32>
      scf.yield %47 : vector<64x16xf32>
    }
    %c7_i32_18 = arith.constant 7 : i32
    %36 = vector.shape_cast %35 : vector<64x16xf32> to vector<4x16x16xf32>
    %c0_19 = arith.constant 0 : index
    %c0_20 = arith.constant 0 : index
    %c0_21 = arith.constant 0 : index
    %c0_22 = arith.constant 0 : index
    %37 = vector.load %arg4[%c0_19, %c0_20, %c0_21, %c0_22] : memref<1x4x16x16xf32, #tpu.memory_space<vmem>>, vector<1x4x16x16xf32>
    %38 = vector.shape_cast %37 : vector<1x4x16x16xf32> to vector<4x16x16xf32>
    %39 = vector.shape_cast %36 : vector<4x16x16xf32> to vector<1x4x16x16xf32>
    tpu.vector_store %arg4[%c0_19, %c0_20, %c0_21, %c0_22], %39 {strides = array<i32>} : memref<1x4x16x16xf32, #tpu.memory_space<vmem>>, vector<1x4x16x16xf32>,
    return
  }
  func.func @transform_0(%arg0: i32, %arg1: i32) -> (i32, i32, i32, i32) {
    %c0_i32 = arith.constant 0 : i32
    %c0_i32_0 = arith.constant 0 : i32
    %c0_i32_1 = arith.constant 0 : i32
    %c0_i32_2 = arith.constant 0 : i32
    return %arg0, %c0_i32, %c0_i32_0, %c0_i32_1 : i32, i32, i32, i32
  }
  func.func @transform_1(%arg0: i32, %arg1: i32) -> (i32, i32, i32, i32) {
    %c0_i32 = arith.constant 0 : i32
    %c0_i32_0 = arith.constant 0 : i32
    %c0_i32_1 = arith.constant 0 : i32
    return %arg0, %arg1, %c0_i32, %c0_i32_0 : i32, i32, i32, i32
  }
  func.func @transform_2(%arg0: i32, %arg1: i32) -> (i32, i32, i32, i32) {
    %c0_i32 = arith.constant 0 : i32
    %c0_i32_0 = arith.constant 0 : i32
    %c0_i32_1 = arith.constant 0 : i32
    return %arg0, %arg1, %c0_i32, %c0_i32_0 : i32, i32, i32, i32
  }
}

</mosaic_0001>

<llo_original>
// kernel: tpu_custom_call.1
$region0: #{tpu_custom_call.1}
  #allocation0 [shape = 'u32[]', space=smem, size = 0x4, offset = 0x4, fixed_abs, tag = 'smem constant byte address 0x4 - core index']
  #allocation1 [shape = 'u32[144,128]{1,0:T(1,128)}', space=vmem, size = 0x12000, scoped, tag = 'internal scratch']
  #allocation2 [shape = 'f32[4,22,16]{2,1,0:T(8,128)}', space=vmem, size = 0xc000, scoped, tag = 'scratch operand']
  %s0 = inlined_call_operand.hbm [shape: f32[2,7,16,16], index: 0, kind: input, shape index: {}]
  %s1 = inlined_call_operand.hbm [shape: f32[2,4,16,16], index: 1, kind: input, shape index: {}]
  %s2 = inlined_call_operand.hbm [shape: f32[2,4,16,16], index: 2, kind: output, shape index: {}]
  %s3 = sld [smem:[#allocation0]]
  $region56: #{tpu_custom_call.1} parent=0
    _
  %s5 = ssub.s32 1, %s3
  %s6 = scalar_select 0, %s5, %s3
  $region1: #{tpu_custom_call.1} parent=0
    #allocation3 [shape = 'u8[114688]{0}', space=vmem, size = 0x1c000, scoped, tag = 'input window, operand 0']
    #allocation4 [shape = 's32[2]{0}', space=sflag, size = 0x8, scoped, tag = 'scoped memory for tpu_custom_call.1']
    #allocation5 [shape = 's32[2]{0}', space=sflag, size = 0x8, scoped, tag = 'scoped memory for tpu_custom_call.1']
    #allocation6 [shape = 'u8[65536]{0}', space=vmem, size = 0x10000, scoped, tag = 'input window, operand 1']
    #allocation7 [shape = 's32[2]{0}', space=sflag, size = 0x8, scoped, tag = 'scoped memory for tpu_custom_call.1']
    #allocation8 [shape = 'u8[65536]{0}', space=vmem, size = 0x10000, scoped, tag = 'output window, operand 0']
    %7 = vsyncpa [#allocation4], 0
    %s8 = scalar_lea.sflag [#allocation4], 1
    %9 = vsyncpa %s8, 0
    %10 = vsyncpa [#allocation7], 0
    %s11 = scalar_lea.sflag [#allocation7], 1
    %12 = vsyncpa %s11, 0
    %13 = vsyncpa [#allocation5], 0
    %s14 = scalar_lea.sflag [#allocation5], 1
    %15 = vsyncpa %s14, 0
    loop: start=0, step=1, limit=4
    $region2: #{tpu_custom_call.1} parent=1 // loop_pre_header
      _
    $region3: #{tpu_custom_call.1} parent=1 // loop_header
      %s17 = sphi 0, %s21
      %p18 = scmp.ge.s32.totalorder %s17, 4
      %s24 = sphi 0, %s36
      %s25 = sphi 0, %s32
      %s26 = sphi 0, %s24
      %s27 = sphi 0, %s25
      %s28 = sphi 0, %s26
      %s29 = sphi 0, %s27
      %s39 = sphi 0, %s41
      %s42 = sphi 0, %s39
      %s43 = sphi 0, %s42
      %s59 = sphi 0, %s43
      %s67 = sphi 0, %s69
      %s70 = sphi 0, %s67
      %s71 = sphi 0, %s70
      %s87 = sphi 0, %s71
      %s95 = sphi 0, %s97
      %s98 = sphi 0, %s95
      %s99 = sphi 0, %s98
      %s115 = sphi 0, %s99
    $region4: #{tpu_custom_call.1} parent=1 // loop_header_branch
      %20 = sbr.rel (%p18) target = $region8
    $region5: #{tpu_custom_call.1} parent=1 // loop_body
      %s22 = ssub.s32 %s17, 1
      %s23 = ssub.s32 %s17, 2
      %s30 = sadd.s32 1, %s25
      %p31 = scmp.ge.s32.totalorder %s30, 1
      %s32 = scalar_select %p31, 0, %s30
      %s33 = sadd.s32 1, %s24
      %s34 = scalar_select %p31, %s33, %s24
      %p35 = scmp.ge.s32.totalorder %s34, 2
      %s36 = scalar_select %p35, 0, %s34
      %s37 = ssub.s32 %s24, %s36
      %p38 = scmp.eq.s32.totalorder %s37, 0
      %s40 = sadd.s32 %s39, 1
      %s41 = scalar_select %p38, %s39, %s40
      %p44 = pneg %p38
      %p45 = scmp.eq.s32.totalorder %s17, 1
      %p46 = por %p44, %p45
      %p47 = scmp.ne.s32.totalorder %s39, %s42
      %p48 = scmp.eq.s32.totalorder %s17, 0
      %p49 = por %p47, %p48
      %p50 = scmp.ne.s32.totalorder %s39, %s42
      %p51 = scmp.eq.s32.totalorder %s22, 1
      %p52 = por %p50, %p51
      %p53 = scmp.ne.s32.totalorder %s42, %s43
      %p54 = scmp.eq.s32.totalorder %s22, 0
      %p55 = por %p53, %p54
      %p56 = scmp.ne.s32.totalorder %s42, %s43
      %p57 = scmp.eq.s32.totalorder %s23, 1
      %p58 = por %p56, %p57
      %p60 = scmp.ne.s32.totalorder %s43, %s59
      %p61 = scmp.eq.s32.totalorder %s23, 0
      %p62 = por %p60, %p61
      %s63 = ssub.s32 %s24, %s36
      %s64 = ssub.s32 %s25, %s32
      %s65 = sor.u32 %s63, %s64
      %p66 = scmp.eq.s32.totalorder %s65, 0
      %s68 = sadd.s32 %s67, 1
      %s69 = scalar_select %p66, %s67, %s68
      %p72 = pneg %p66
      %p73 = scmp.eq.s32.totalorder %s17, 1
      %p74 = por %p72, %p73
      %p75 = scmp.ne.s32.totalorder %s67, %s70
      %p76 = scmp.eq.s32.totalorder %s17, 0
      %p77 = por %p75, %p76
      %p78 = scmp.ne.s32.totalorder %s67, %s70
      %p79 = scmp.eq.s32.totalorder %s22, 1
      %p80 = por %p78, %p79
      %p81 = scmp.ne.s32.totalorder %s70, %s71
      %p82 = scmp.eq.s32.totalorder %s22, 0
      %p83 = por %p81, %p82
      %p84 = scmp.ne.s32.totalorder %s70, %s71
      %p85 = scmp.eq.s32.totalorder %s23, 1
      %p86 = por %p84, %p85
      %p88 = scmp.ne.s32.totalorder %s71, %s87
      %p89 = scmp.eq.s32.totalorder %s23, 0
      %p90 = por %p88, %p89
      %s91 = ssub.s32 %s24, %s36
      %s92 = ssub.s32 %s25, %s32
      %s93 = sor.u32 %s91, %s92
      %p94 = scmp.eq.s32.totalorder %s93, 0
      %s96 = sadd.s32 %s95, 1
      %s97 = scalar_select %p94, %s95, %s96
      %p100 = pneg %p94
      %p101 = scmp.eq.s32.totalorder %s17, 1
      %p102 = por %p100, %p101
      %p103 = scmp.ne.s32.totalorder %s95, %s98
      %p104 = scmp.eq.s32.totalorder %s17, 0
      %p105 = por %p103, %p104
      %p106 = scmp.ne.s32.totalorder %s95, %s98
      %p107 = scmp.eq.s32.totalorder %s22, 1
      %p108 = por %p106, %p107
      %p109 = scmp.ne.s32.totalorder %s98, %s99
      %p110 = scmp.eq.s32.totalorder %s22, 0
      %p111 = por %p109, %p110
      %p112 = scmp.ne.s32.totalorder %s98, %s99
      %p113 = scmp.eq.s32.totalorder %s23, 1
      %p114 = por %p112, %p113
      %p116 = scmp.ne.s32.totalorder %s99, %s115
      %p117 = scmp.eq.s32.totalorder %s23, 0
      %p118 = por %p116, %p117
      %p119 = scmp.le.s32.totalorder 1, %s17
      %p120 = scmp.lt.s32.totalorder %s17, 3
      %p121 = pnand %p119, %p120
      %p122 = pneg %p121
      // Predicated region
      $region9: #{tpu_custom_call.1} parent=5 // pred_check
        _
      $region10: #{tpu_custom_call.1} parent=5 // pred_check_branch
        %124 = sbr.rel (%p121) target = $region12
      $region11: #{tpu_custom_call.1} parent=5 // pred_region
        %s125 = ssub.s32 %s17, 1
      $region12: #{tpu_custom_call.1} parent=5 // pred_fallthru
        _
      %p126 = scmp.lt.s32.totalorder %s17, 2
      // Predicated region
      $region13: #{tpu_custom_call.1} parent=5 // pred_check
        %p127 = pneg %p126
      $region14: #{tpu_custom_call.1} parent=5 // pred_check_branch
        %129 = sbr.rel (%p127) target = $region16
      $region15: #{tpu_custom_call.1} parent=5 // pred_region
        // Predicated region
        $region17: #{tpu_custom_call.1} parent=15 // pred_check
          %p130 = pneg %p49
        $region18: #{tpu_custom_call.1} parent=15 // pred_check_branch
          %132 = sbr.rel (%p130) target = $region20
        $region19: #{tpu_custom_call.1} parent=15 // pred_region
          %s133 = sand.u32 %s39, 1
          %s134 = scalar_lea.sflag [#allocation4], %s133
          %s135 = sand.u32 %s39, 1
          %s136 = smul.addr %s135, 112
          %s137 = scalar_lea.vmem [#allocation3], %s136
          %s139 = ssub.s32 1792, 1792
          %140 = vsyncadd %s134, %s139
          %s141 = smul.addr %s24, 14
          %s142 = smul.addr %s141, 128
          %s143 = scalar_lea.hbm %s0, %s142
          %s144 = sshll.u32 %s137, 4
          %s145 = int_to_ptr.vmem [resolvable:$true] %s144
          %150 = dma.hbm_to_vmem [thread:$0]  %s143, 1792, %s145, %s134, 128, 128, 8
        $region20: #{tpu_custom_call.1} parent=15 // pred_fallthru
          _
        // Predicated region
        $region21: #{tpu_custom_call.1} parent=15 // pred_check
          %p151 = pneg %p77
        $region22: #{tpu_custom_call.1} parent=15 // pred_check_branch
          %153 = sbr.rel (%p151) target = $region24
        $region23: #{tpu_custom_call.1} parent=15 // pred_region
          %s154 = sand.u32 %s67, 1
          %s155 = scalar_lea.sflag [#allocation7], %s154
          %s156 = sand.u32 %s67, 1
          %s157 = smul.addr %s156, 64
          %s158 = scalar_lea.vmem [#allocation6], %s157
          %s159 = smul.u32 4, %s25
          %s161 = ssub.s32 1024, 1024
          %162 = vsyncadd %s155, %s161
          %s163 = smul.addr %s159, 2
          %s164 = smul.addr %s24, 8
          %s165 = sadd.s32 %s163, %s164
          %s166 = smul.addr %s165, 128
          %s167 = scalar_lea.hbm %s1, %s166
          %s168 = sshll.u32 %s158, 4
          %s169 = int_to_ptr.vmem [resolvable:$true] %s168
          %174 = dma.hbm_to_vmem [thread:$0]  %s167, 1024, %s169, %s155, 128, 128, 8
        $region24: #{tpu_custom_call.1} parent=15 // pred_fallthru
          _
      $region16: #{tpu_custom_call.1} parent=5 // pred_fallthru
        _
      %p175 = scmp.le.s32.totalorder 1, %s17
      %p176 = scmp.lt.s32.totalorder %s17, 3
      %p177 = pnand %p175, %p176
      %p178 = pneg %p177
      // Predicated region
      $region25: #{tpu_custom_call.1} parent=5 // pred_check
        _
      $region26: #{tpu_custom_call.1} parent=5 // pred_check_branch
        %180 = sbr.rel (%p177) target = $region28
      $region27: #{tpu_custom_call.1} parent=5 // pred_region
        %s181 = ssub.s32 %s17, 1
        %s182 = sand.u32 %s42, 1
        %s183 = scalar_lea.sflag [#allocation4], %s182
        %s184 = sand.u32 %s42, 1
        %s185 = smul.addr %s184, 112
        %s186 = scalar_lea.vmem [#allocation3], %s185
        // Predicated region
        $region29: #{tpu_custom_call.1} parent=27 // pred_check
          %p187 = pneg %p55
        $region30: #{tpu_custom_call.1} parent=27 // pred_check_branch
          %189 = sbr.rel (%p187) target = $region32
        $region31: #{tpu_custom_call.1} parent=27 // pred_region
          %190 = dma.done %s183, 1792
        $region32: #{tpu_custom_call.1} parent=27 // pred_fallthru
          _
        %s191 = sand.u32 %s70, 1
        %s192 = scalar_lea.sflag [#allocation7], %s191
        %s193 = sand.u32 %s70, 1
        %s194 = smul.addr %s193, 64
        %s195 = scalar_lea.vmem [#allocation6], %s194
        // Predicated region
        $region33: #{tpu_custom_call.1} parent=27 // pred_check
          %p196 = pneg %p83
        $region34: #{tpu_custom_call.1} parent=27 // pred_check_branch
          %198 = sbr.rel (%p196) target = $region36
        $region35: #{tpu_custom_call.1} parent=27 // pred_region
          %199 = dma.done %s192, 1024
        $region36: #{tpu_custom_call.1} parent=27 // pred_fallthru
          _
        %s200 = sand.u32 %s42, 1
        %s201 = scalar_lea.sflag [#allocation4], %s200
        %s202 = sand.u32 %s42, 1
        %s203 = smul.addr %s202, 112
        %s204 = scalar_lea.vmem [#allocation3], %s203
        %p205 = pneg %p55
        %p206 = pneg %p52
        %s207 = sand.u32 %s70, 1
        %s208 = scalar_lea.sflag [#allocation7], %s207
        %s209 = sand.u32 %s70, 1
        %s210 = smul.addr %s209, 64
        %s211 = scalar_lea.vmem [#allocation6], %s210
        %p212 = pneg %p83
        %p213 = pneg %p80
        %p214 = pneg %p111
        %p215 = pneg %p108
        %s216 = sand.u32 %s98, 1
        %s217 = scalar_lea.sflag [#allocation5], %s216
        %s218 = sand.u32 %s98, 1
        %s219 = smul.addr %s218, 64
        %s220 = scalar_lea.vmem [#allocation8], %s219
        %s221 = smul.u32 4, %s27
        %s222 = smul.u32 4, %s27
        %v223 = vld [vmem:[%s195] sm:$0xff]
        %v224 = vld [vmem:[%s195 + $0x8] sm:$0xff]
        %v225 = vld [vmem:[%s195 + $0x10] sm:$0xff]
        %v226 = vld [vmem:[%s195 + $0x18] sm:$0xff]
        %v227 = vld [vmem:[%s195 + $0x20] sm:$0xff]
        %v228 = vld [vmem:[%s195 + $0x28] sm:$0xff]
        %v229 = vld [vmem:[%s195 + $0x30] sm:$0xff]
        %v230 = vld [vmem:[%s195 + $0x38] sm:$0xff]
        %vm231 = vcmask 130048
        %232 = vst.msk [vmem:[#allocation2 + $0x3] sm:$0xff] %vm231, %v223
        %233 = vst.msk [vmem:[#allocation2 + $0xb] sm:$0xff] %vm231, %v224
        %234 = vst.msk [vmem:[#allocation2 + $0x1b] sm:$0xff] %vm231, %v225
        %235 = vst.msk [vmem:[#allocation2 + $0x23] sm:$0xff] %vm231, %v226
        %236 = vst.msk [vmem:[#allocation2 + $0x33] sm:$0xff] %vm231, %v227
        %237 = vst.msk [vmem:[#allocation2 + $0x3b] sm:$0xff] %vm231, %v228
        %238 = vst.msk [vmem:[#allocation2 + $0x4b] sm:$0xff] %vm231, %v229
        %239 = vst.msk [vmem:[#allocation2 + $0x53] sm:$0xff] %vm231, %v230
        %vm240 = vcmask 125955
        %241 = vst.msk [vmem:[#allocation2 - $0x3] sm:$0x8] %vm240, %v223
        %242 = vst.msk [vmem:[#allocation2 + $0x15] sm:$0x8] %vm240, %v225
        %243 = vst.msk [vmem:[#allocation2 + $0x2d] sm:$0x8] %vm240, %v227
        %244 = vst.msk [vmem:[#allocation2 + $0x45] sm:$0x8] %vm240, %v229
        %vm245 = vcmask 124930
        %246 = vst.msk [vmem:[#allocation2 - $0x1] sm:$0x4] %vm245, %v223
        %247 = vst.msk [vmem:[#allocation2 + $0x17] sm:$0x4] %vm245, %v225
        %248 = vst.msk [vmem:[#allocation2 + $0x2f] sm:$0x4] %vm245, %v227
        %249 = vst.msk [vmem:[#allocation2 + $0x47] sm:$0x4] %vm245, %v229
        %vm250 = vcmask 123905
        %251 = vst.msk [vmem:[#allocation2 + $0x1] sm:$0x2] %vm250, %v223
        %252 = vst.msk [vmem:[#allocation2 + $0x19] sm:$0x2] %vm250, %v225
        %253 = vst.msk [vmem:[#allocation2 + $0x31] sm:$0x2] %vm250, %v227
        %254 = vst.msk [vmem:[#allocation2 + $0x49] sm:$0x2] %vm250, %v229
        %vm255 = vcmask 129030
        %256 = vst.msk [vmem:[#allocation2 + $0xd] sm:$0x40] %vm255, %v224
        %257 = vst.msk [vmem:[#allocation2 + $0x25] sm:$0x40] %vm255, %v226
        %258 = vst.msk [vmem:[#allocation2 + $0x3d] sm:$0x40] %vm255, %v228
        %259 = vst.msk [vmem:[#allocation2 + $0x55] sm:$0x40] %vm255, %v230
        %vm260 = vcmask 128005
        %261 = vst.msk [vmem:[#allocation2 + $0xf] sm:$0x20] %vm260, %v224
        %262 = vst.msk [vmem:[#allocation2 + $0x27] sm:$0x20] %vm260, %v226
        %263 = vst.msk [vmem:[#allocation2 + $0x3f] sm:$0x20] %vm260, %v228
        %264 = vst.msk [vmem:[#allocation2 + $0x57] sm:$0x20] %vm260, %v230
        %vm265 = vcmask 126980
        %266 = vst.msk [vmem:[#allocation2 + $0x11] sm:$0x10] %vm265, %v224
        %267 = vst.msk [vmem:[#allocation2 + $0x29] sm:$0x10] %vm265, %v226
        %268 = vst.msk [vmem:[#allocation2 + $0x41] sm:$0x10] %vm265, %v228
        %269 = vst.msk [vmem:[#allocation2 + $0x59] sm:$0x10] %vm265, %v230
        loop: start=0, step=1, limit=7
        $region37: #{tpu_custom_call.1} parent=27 // loop_pre_header
          _
        $region38: #{tpu_custom_call.1} parent=27 // loop_header
          %s271 = sphi 0, %s275
          %p272 = scmp.ge.s32.totalorder %s271, 7
          %v276 = vphi 0.0, %v426
          %v277 = vphi 0.0, %v427
          %v278 = vphi 0.0, %v428
          %v279 = vphi 0.0, %v429
          %v280 = vphi 0.0, %v430
          %v281 = vphi 0.0, %v431
          %v282 = vphi 0.0, %v432
          %v283 = vphi 0.0, %v433
        $region39: #{tpu_custom_call.1} parent=27 // loop_header_branch
          %274 = sbr.rel (%p272) target = $region43
        $region40: #{tpu_custom_call.1} parent=27 // loop_body
          %s284 = scalar_lea.vmem [#allocation2], %s271
          %v285 = vld [vmem:[%s284] sm:$0xff]
          %v286 = vld [vmem:[%s284 + $0x8] sm:$0xff]
          %v287 = vld [vmem:[%s284 + $0x18] sm:$0xff]
          %v288 = vld [vmem:[%s284 + $0x20] sm:$0xff]
          %v289 = vld [vmem:[%s284 + $0x30] sm:$0xff]
          %v290 = vld [vmem:[%s284 + $0x38] sm:$0xff]
          %v291 = vld [vmem:[%s284 + $0x48] sm:$0xff]
          %v292 = vld [vmem:[%s284 + $0x50] sm:$0xff]
          %s293 = smul.u32 %s271, 16
          %s294 = scalar_lea.vmem %s186, %s293 [#allocation3]
          %v295 = vld [vmem:[%s294] sm:$0xff]
          %v296 = vld [vmem:[%s294 + $0x8] sm:$0xff]
          %v298 = vsel %vm231, %v285, 0
          %v301 = vsel %vm231, %v286, 0
          %v304 = vsel %vm231, %v287, 0
          %v307 = vsel %vm231, %v288, 0
          %v310 = vsel %vm231, %v289, 0
          %v313 = vsel %vm231, %v290, 0
          %v316 = vsel %vm231, %v291, 0
          %v319 = vsel %vm231, %v292, 0
          %321 = vmatprep.subr.mxu0 0.0
          %322 = vmatpush1.msra.mxu0 0.0
          %323 = vmatprep.subr.mxu0 0.0
          %324 = vmatpush1.msra.mxu0 0.0
          %325 = vmatprep.subr.mxu0 0.0
          %326 = vmatpush1.msra.mxu0 0.0
          %327 = vmatprep.subr.mxu0 0.0
          %328 = vmatpush1.msra.mxu0 0.0
          %329 = vmatprep.subr.mxu0 0.0
          %330 = vmatpush1.msra.mxu0 0.0
          %331 = vmatprep.subr.mxu0 0.0
          %332 = vmatpush1.msra.mxu0 0.0
          %333 = vmatprep.subr.mxu0 0.0
          %334 = vmatpush1.msra.mxu0 0.0
          %335 = vmatprep.subr.mxu0 0.0
          %336 = vmatpush1.msra.mxu0 0.0
          %337 = vmatprep.subr.mxu0 0.0
          %338 = vmatpush1.msra.mxu0 0.0
          %339 = vmatprep.subr.mxu0 0.0
          %340 = vmatpush1.msra.mxu0 0.0
          %341 = vmatprep.subr.mxu0 0.0
          %342 = vmatpush1.msra.mxu0 0.0
          %343 = vmatprep.subr.mxu0 0.0
          %344 = vmatpush1.msra.mxu0 0.0
          %345 = vmatprep.subr.mxu0 0.0
          %346 = vmatpush1.msra.mxu0 0.0
          %347 = vmatprep.subr.mxu0 0.0
          %348 = vmatpush1.msra.mxu0 0.0
          %349 = vmatprep.subr.mxu0 0.0
          %350 = vmatpush1.msra.mxu0 %v296
          %351 = vmatprep.subr.mxu0 0.0
          %352 = vmatpush1.msra.mxu0 %v295
          %353 = vmatprep.subr.mxu0 0.0
          %354 = vmatpush2.msra.mxu0 0.0
          %355 = vmatprep.subr.mxu0 0.0
          %356 = vmatpush2.msra.mxu0 0.0
          %357 = vmatprep.subr.mxu0 0.0
          %358 = vmatpush2.msra.mxu0 0.0
          %359 = vmatprep.subr.mxu0 0.0
          %360 = vmatpush2.msra.mxu0 0.0
          %361 = vmatprep.subr.mxu0 0.0
          %362 = vmatpush2.msra.mxu0 0.0
          %363 = vmatprep.subr.mxu0 0.0
          %364 = vmatpush2.msra.mxu0 0.0
          %365 = vmatprep.subr.mxu0 0.0
          %366 = vmatpush2.msra.mxu0 0.0
          %367 = vmatprep.subr.mxu0 0.0
          %368 = vmatpush2.msra.mxu0 0.0
          %369 = vmatprep.subr.mxu0 0.0
          %370 = vmatpush2.msra.mxu0 0.0
          %371 = vmatprep.subr.mxu0 0.0
          %372 = vmatpush2.msra.mxu0 0.0
          %373 = vmatprep.subr.mxu0 0.0
          %374 = vmatpush2.msra.mxu0 0.0
          %375 = vmatprep.subr.mxu0 0.0
          %376 = vmatpush2.msra.mxu0 0.0
          %377 = vmatprep.subr.mxu0 0.0
          %378 = vmatpush2.msra.mxu0 0.0
          %379 = vmatprep.subr.mxu0 0.0
          %380 = vmatpush2.msra.mxu0 0.0
          %381 = vmatprep.subr.mxu0 0.0
          %382 = vmatpush2.msra.mxu0 0.0
          %383 = vmatprep.subr.mxu0 0.0
          %384 = vmatpush2.msra.mxu0 0.0
          %385 = vmatprep.mubr.f32.mxu0 0.0
          %386 = vmatmul.mubr.f32.gmra.mxu0 %v298
          %v387 = vpop.f32.mrf.mxu0
          %v388 = vadd.f32 0.0, %v387
          %v389 = vpop.f32.mrf.mxu0
          %390 = vmatprep.mubr.f32.mxu0 0.0
          %391 = vmatmul.mubr.f32.gmra.mxu0 %v301
          %v392 = vpop.f32.mrf.mxu0
          %v393 = vadd.f32 0.0, %v392
          %v394 = vpop.f32.mrf.mxu0
          %395 = vmatprep.mubr.f32.mxu0 0.0
          %396 = vmatmul.mubr.f32.gmra.mxu0 %v304
          %v397 = vpop.f32.mrf.mxu0
          %v398 = vadd.f32 0.0, %v397
          %v399 = vpop.f32.mrf.mxu0
          %400 = vmatprep.mubr.f32.mxu0 0.0
          %401 = vmatmul.mubr.f32.gmra.mxu0 %v307
          %v402 = vpop.f32.mrf.mxu0
          %v403 = vadd.f32 0.0, %v402
          %v404 = vpop.f32.mrf.mxu0
          %405 = vmatprep.mubr.f32.mxu0 0.0
          %406 = vmatmul.mubr.f32.gmra.mxu0 %v310
          %v407 = vpop.f32.mrf.mxu0
          %v408 = vadd.f32 0.0, %v407
          %v409 = vpop.f32.mrf.mxu0
          %410 = vmatprep.mubr.f32.mxu0 0.0
          %411 = vmatmul.mubr.f32.gmra.mxu0 %v313
          %v412 = vpop.f32.mrf.mxu0
          %v413 = vadd.f32 0.0, %v412
          %v414 = vpop.f32.mrf.mxu0
          %415 = vmatprep.mubr.f32.mxu0 0.0
          %416 = vmatmul.mubr.f32.gmra.mxu0 %v316
          %v417 = vpop.f32.mrf.mxu0
          %v418 = vadd.f32 0.0, %v417
          %v419 = vpop.f32.mrf.mxu0
          %420 = vmatprep.mubr.f32.mxu0 0.0
          %421 = vmatmul.mubr.f32.gmra.mxu0 %v319
          %v422 = vpop.f32.mrf.mxu0
          %v423 = vadd.f32 0.0, %v422
          %v424 = vpop.f32.mrf.mxu0
          %425 = vdwg.mxu0
          %v426 = vadd.f32 %v276, %v388
          %v427 = vadd.f32 %v277, %v393
          %v428 = vadd.f32 %v278, %v398
          %v429 = vadd.f32 %v279, %v403
          %v430 = vadd.f32 %v280, %v408
          %v431 = vadd.f32 %v281, %v413
          %v432 = vadd.f32 %v282, %v418
          %v433 = vadd.f32 %v283, %v423
        $region41: #{tpu_custom_call.1} parent=27 // loop_footer
          %s275 = sadd.s32 1, %s271
        $region42: #{tpu_custom_call.1} parent=27 // loop_footer_branch
          %270 = sbr.rel target = $region38
        $region43: #{tpu_custom_call.1} parent=27 // loop_exit
          _
        %434 = vst.msk [vmem:[%s220] sm:$0xff] %vm231, %v276
        %435 = vst.msk [vmem:[%s220 + $0x8] sm:$0xff] %vm231, %v277
        %436 = vst.msk [vmem:[%s220 + $0x10] sm:$0xff] %vm231, %v278
        %437 = vst.msk [vmem:[%s220 + $0x18] sm:$0xff] %vm231, %v279
        %438 = vst.msk [vmem:[%s220 + $0x20] sm:$0xff] %vm231, %v280
        %439 = vst.msk [vmem:[%s220 + $0x28] sm:$0xff] %vm231, %v281
        %440 = vst.msk [vmem:[%s220 + $0x30] sm:$0xff] %vm231, %v282
        %441 = vst.msk [vmem:[%s220 + $0x38] sm:$0xff] %vm231, %v283
        %s442 = sand.u32 %s98, 1
        %s443 = scalar_lea.sflag [#allocation5], %s442
        %s444 = sand.u32 %s98, 1
        %s445 = smul.addr %s444, 64
        %s446 = scalar_lea.vmem [#allocation8], %s445
        // Predicated region
        $region44: #{tpu_custom_call.1} parent=27 // pred_check
          %p447 = pneg %p108
        $region45: #{tpu_custom_call.1} parent=27 // pred_check_branch
          %449 = sbr.rel (%p447) target = $region47
        $region46: #{tpu_custom_call.1} parent=27 // pred_region
          %s450 = smul.u32 4, %s27
          %s452 = ssub.s32 1024, 1024
          %453 = vsyncadd %s443, %s452
          %s454 = smul.addr %s450, 2
          %s455 = smul.addr %s26, 8
          %s456 = sadd.s32 %s454, %s455
          %s457 = smul.addr %s456, 128
          %s458 = scalar_lea.hbm %s2, %s457
          %s459 = sshll.u32 %s446, 4
          %s460 = int_to_ptr.vmem [resolvable:$true] %s459
          %465 = dma.vmem_to_hbm [thread:$0]  %s460, 1024, %s458, %s443, 128, 128, 8
        $region47: #{tpu_custom_call.1} parent=27 // pred_fallthru
          _
      $region28: #{tpu_custom_call.1} parent=5 // pred_fallthru
        _
      %p466 = scmp.le.s32.totalorder 2, %s17
      // Predicated region
      $region48: #{tpu_custom_call.1} parent=5 // pred_check
        %p467 = pneg %p466
      $region49: #{tpu_custom_call.1} parent=5 // pred_check_branch
        %469 = sbr.rel (%p467) target = $region51
      $region50: #{tpu_custom_call.1} parent=5 // pred_region
        %s470 = ssub.s32 %s17, 2
        // Predicated region
        $region52: #{tpu_custom_call.1} parent=50 // pred_check
          %p471 = pneg %p114
        $region53: #{tpu_custom_call.1} parent=50 // pred_check_branch
          %473 = sbr.rel (%p471) target = $region55
        $region54: #{tpu_custom_call.1} parent=50 // pred_region
          %s474 = sand.u32 %s99, 1
          %s475 = scalar_lea.sflag [#allocation5], %s474
          %s476 = sand.u32 %s99, 1
          %s477 = smul.addr %s476, 64
          %s478 = scalar_lea.vmem [#allocation8], %s477
          %479 = dma.done %s475, 1024
        $region55: #{tpu_custom_call.1} parent=50 // pred_fallthru
          _
      $region51: #{tpu_custom_call.1} parent=5 // pred_fallthru
        _
    $region6: #{tpu_custom_call.1} parent=1 // loop_footer
      %s21 = sadd.s32 1, %s17
    $region7: #{tpu_custom_call.1} parent=1 // loop_footer_branch
      %16 = sbr.rel target = $region3
    $region8: #{tpu_custom_call.1} parent=1 // loop_exit
      _
    %480 = vsyncpa [#allocation4], 1
    %s481 = scalar_lea.sflag [#allocation4], 1
    %482 = vsyncpa %s481, 1
    %483 = vsyncpa [#allocation7], 1
    %s484 = scalar_lea.sflag [#allocation7], 1
    %485 = vsyncpa %s484, 1
    %486 = vsyncpa [#allocation5], 1
    %s487 = scalar_lea.sflag [#allocation5], 1
    %488 = vsyncpa %s487, 1

</llo_original>
